<compile_context>
chip_gen: v6e
topology: v6e:2x2x1
jax: 0.10.0
libtpu: 0.0.40
codegen_flags: <defaults>
</compile_context>

<pallas_src>
import functools

import jax
import jax.numpy as jnp
import numpy as np
from jax.experimental import pallas as pl
from jax.experimental.pallas import tpu as pltpu


# ----------------------------------------------------------------------------
# Kernels
# ----------------------------------------------------------------------------
def _masked_ce_kernel(logits_ref, tgt_ref, mask_ref, num_ref, den_ref,
                      *, tile, bps, hw, ragged):
    s = pl.program_id(1)
    p = pl.program_id(2)

    # Zero the per-(batch, split) accumulators at the first pixel tile.
    @pl.when(p == 0)
    def _():
        num_ref[...] = jnp.zeros_like(num_ref)
        den_ref[...] = jnp.zeros_like(den_ref)

    logits = logits_ref[...].astype(jnp.float32)      # (1, C, T) — C on sublanes
    tgt = tgt_ref[...]                                # (1, 1, T) int32
    mask = mask_ref[...]                              # (1, 1, T) f32

    if ragged:
        # Lane-validity for the ragged last tile / phantom (clamped) blocks.
        gblock = s * bps + p
        valid_cnt = hw - gblock * tile                # may be <= 0 (phantom)
        lane = jax.lax.broadcasted_iota(jnp.int32, (1, 1, tile), 2)
        valid = lane < valid_cnt                      # (1,1,T) bool
        logits = jnp.where(valid, logits, 0.0)        # neutralize BEFORE exp/lse
        mask = jnp.where(valid, mask, 0.0)

    # Numerically-stable log-softmax denominator over the class (sublane) axis.
    m = jnp.max(logits, axis=1, keepdims=True)                              # (1,1,T)
    lse = m + jnp.log(jnp.sum(jnp.exp(logits - m), axis=1, keepdims=True))  # (1,1,T)

    # Target-class logit via where-select (no one-hot cast/multiply).
    cls_ids = jax.lax.broadcasted_iota(jnp.int32, logits.shape, 1)          # (1,C,T)
    tgt_logit = jnp.sum(jnp.where(cls_ids == tgt, logits, 0.0),
                        axis=1, keepdims=True)                              # (1,1,T)

    loss = lse - tgt_logit                                                  # (1,1,T)

    # Lane-wide VPU accumulation (no per-step cross-lane reduce).
    num_ref[...] = num_ref[...] + loss * mask
    den_ref[...] = den_ref[...] + mask


def _plain_ce_kernel(logits_ref, tgt_ref, num_ref, *, tile, bps, hw, ragged):
    s = pl.program_id(1)
    p = pl.program_id(2)

    @pl.when(p == 0)
    def _():
        num_ref[...] = jnp.zeros_like(num_ref)

    logits = logits_ref[...].astype(jnp.float32)      # (1, C, T)
    tgt = tgt_ref[...]                                # (1, 1, T)

    if ragged:
        gblock = s * bps + p
        valid_cnt = hw - gblock * tile
        lane = jax.lax.broadcasted_iota(jnp.int32, (1, 1, tile), 2)
        valid = lane < valid_cnt
        logits = jnp.where(valid, logits, 0.0)

    m = jnp.max(logits, axis=1, keepdims=True)
    lse = m + jnp.log(jnp.sum(jnp.exp(logits - m), axis=1, keepdims=True))
    cls_ids = jax.lax.broadcasted_iota(jnp.int32, logits.shape, 1)
    tgt_logit = jnp.sum(jnp.where(cls_ids == tgt, logits, 0.0),
                        axis=1, keepdims=True)
    loss = lse - tgt_logit

    if ragged:
        loss = jnp.where(valid, loss, 0.0)

    num_ref[...] = num_ref[...] + loss


# ----------------------------------------------------------------------------
# Wrapper
# ----------------------------------------------------------------------------
def _vmem_limit_bytes():
    try:
        cap = int(pltpu.get_tpu_info().vmem_capacity_bytes)
    except Exception:
        cap = 64 * 1024 * 1024  # conservative (v7x-sized) fallback
    # leave headroom below physical capacity; cap at 96 MiB
    return min((cap * 3) // 4, 96 * 1024 * 1024)


def _pick_tile(hw, max_tile):
    """Pixel tile size (no padding). Prefer divisors of hw; else ragged max."""
    if hw <= max_tile:
        return hw                          # full pixel row (block == full dim)
    t_max = max(128, (max_tile // 128) * 128)
    t = t_max
    # Only accept a dividing tile if it keeps at least half of the max tile.
    while t >= max(128, t_max // 2):
        if hw % t == 0:
            return t
        t -= 128
    return t_max                           # ragged last tile handled in-kernel


def mask_cross_entropy_loss(pred, target, mask=None, *, max_tile_override=None):
    """pred: (N,C,H,W) float logits, target: (N,H,W) int, mask: (N,H,W) or None."""
    N, C, H, W = pred.shape
    HW = H * W
    has_mask = mask is not None

    vmem_limit = _vmem_limit_bytes()
    budget = (vmem_limit * 4) // 5
    itemsize = jnp.dtype(pred.dtype).itemsize
    aux_bytes = 4 + (4 if has_mask else 0)            # tgt (+ mask) streams
    # double-buffered input streams + ~4 live (1,C,T) f32 temporaries + accs
    bytes_per_px = 2 * (C * itemsize + aux_bytes) + 4 * C * 4 + 16
    max_tile = budget // bytes_per_px
    max_tile = max(128, min(65536, (max_tile // 128) * 128))
    if max_tile_override is not None:
        max_tile = max_tile_override

    tile = _pick_tile(HW, max_tile)
    total_blocks = pl.cdiv(HW, tile)
    ragged = (total_blocks * tile != HW)

    # Dual-TensorCore chips (v7x): expose a second parallel axis when N == 1.
    splits = 2 if (N == 1 and total_blocks >= 2) else 1
    bps = pl.cdiv(total_blocks, splits)                # pixel blocks per split
    have_phantom = splits * bps > total_blocks
    ragged = ragged or have_phantom
    grid = (N, splits, bps)

    logits = pred.reshape(N, C, HW)                    # contiguous, no transpose
    tgt = target.reshape(N, 1, HW).astype(jnp.int32)
    msk = mask.reshape(N, 1, HW).astype(jnp.float32) if has_mask else None

    last_block = total_blocks - 1
    if splits == 1:
        def px_map(n, s, p):
            return (n, 0, p)
    elif have_phantom:
        def px_map(n, s, p):
            return (n, 0, jnp.minimum(s * bps + p, last_block))
    else:
        def px_map(n, s, p):
            return (n, 0, s * bps + p)

    logits_spec = pl.BlockSpec((1, C, tile), px_map)
    row_spec = pl.BlockSpec((1, 1, tile), px_map)
    acc_spec = pl.BlockSpec((1, 1, tile), lambda n, s, p: (n, s, 0))

    cparams = pltpu.CompilerParams(
        dimension_semantics=("parallel", "parallel", "arbitrary"),
        vmem_limit_bytes=vmem_limit,
    )

    in_bytes = (logits.size * itemsize
                + tgt.size * 4
                + (msk.size * 4 if has_mask else 0))
    out_bytes = N * splits * tile * 4 * (2 if has_mask else 1)
    cost = pl.CostEstimate(
        flops=int(6 * N * HW * C),
        transcendentals=int(N * HW * (C + 1)),
        bytes_accessed=int(in_bytes + out_bytes),
    )

    kern_kwargs = dict(tile=tile, bps=bps, hw=HW, ragged=ragged)

    if has_mask:
        nums, dens = pl.pallas_call(
            functools.partial(_masked_ce_kernel, **kern_kwargs),
            out_shape=(jax.ShapeDtypeStruct((N, splits, tile), jnp.float32),
                       jax.ShapeDtypeStruct((N, splits, tile), jnp.float32)),
            grid=grid,
            in_specs=[logits_spec, row_spec, row_spec],
            out_specs=(acc_spec, acc_spec),
            compiler_params=cparams,
            cost_estimate=cost,
        )(logits, tgt, msk)
        return jnp.sum(nums) / jnp.sum(dens)
    else:
        nums = pl.pallas_call(
            functools.partial(_plain_ce_kernel, **kern_kwargs),
            out_shape=jax.ShapeDtypeStruct((N, splits, tile), jnp.float32),
            grid=grid,
            in_specs=[logits_spec, row_spec],
            out_specs=acc_spec,
            compiler_params=cparams,
            cost_estimate=cost,
        )(logits, tgt)
        return jnp.sum(nums) / jnp.float32(N * HW)


# ----------------------------------------------------------------------------
# Pure-JAX reference (replicates torch.nn.CrossEntropyLoss(reduction='none'))
# ----------------------------------------------------------------------------
def _reference(pred, target, mask=None):
    logits = jnp.moveaxis(pred, 1, -1).astype(jnp.float32)            # (N,H,W,C)
    logp = jax.nn.log_softmax(logits, axis=-1)
    loss = -jnp.take_along_axis(logp, target[..., None].astype(jnp.int32),
                                axis=-1)[..., 0]
    if mask is not None:
        return (loss * mask).sum() / mask.sum()
    return loss.sum() / loss.size


if __name__ == "__main__":
    key = jax.random.PRNGKey(0)

    # --- Test 1: N=2, C=4, 16x16 — single-tile path, masked + unmasked -------
    k1, k2, k3 = jax.random.split(key, 3)
    N, C, H, W = 2, 4, 16, 16
    pred = jax.random.normal(k1, (N, C, H, W), dtype=jnp.float32)
    target = jax.random.randint(k2, (N, H, W), 0, C, dtype=jnp.int32)
    mask = (jax.random.uniform(k3, (N, H, W)) > 0.5).astype(jnp.float32)

    out_masked = jax.block_until_ready(mask_cross_entropy_loss(pred, target, mask))
    ref_masked = _reference(pred, target, mask)
    assert np.allclose(np.asarray(out_masked), np.asarray(ref_masked),
                       rtol=1e-5, atol=1e-5)

    out_plain = jax.block_until_ready(mask_cross_entropy_loss(pred, target, None))
    ref_plain = _reference(pred, target, None)
    assert np.allclose(np.asarray(out_plain), np.asarray(ref_plain),
                       rtol=1e-5, atol=1e-5)

    # --- Test 2: N=1, C=5, 18x18 with forced small tile ----------------------
    # Exercises: ragged last tile, dual-core split axis, phantom-block clamp.
    k4, k5, k6 = jax.random.split(jax.random.PRNGKey(1), 3)
    N2, C2, H2, W2 = 1, 5, 18, 18
    pred2 = jax.random.normal(k4, (N2, C2, H2, W2), dtype=jnp.float32)
    target2 = jax.random.randint(k5, (N2, H2, W2), 0, C2, dtype=jnp.int32)
    mask2 = (jax.random.uniform(k6, (N2, H2, W2)) > 0.3).astype(jnp.float32)

    out2_m = jax.block_until_ready(
        mask_cross_entropy_loss(pred2, target2, mask2, max_tile_override=128))
    ref2_m = _reference(pred2, target2, mask2)
    assert np.allclose(np.asarray(out2_m), np.asarray(ref2_m), rtol=1e-5, atol=1e-5)

    out2_p = jax.block_until_ready(
        mask_cross_entropy_loss(pred2, target2, None, max_tile_override=128))
    ref2_p = _reference(pred2, target2, None)
    assert np.allclose(np.asarray(out2_p), np.asarray(ref2_p), rtol=1e-5, atol=1e-5)

    print("KERNEL_OK")
</pallas_src>

<mosaic_0001>
module attributes {stable_mosaic.version = 11 : i64} {
  func.func @_masked_ce_kernel(%arg0: i32, %arg1: i32, %arg2: i32, %arg3: memref<1x4x256xf32, #tpu.memory_space<vmem>>, %arg4: memref<1x1x256xi32, #tpu.memory_space<vmem>>, %arg5: memref<1x1x256xf32, #tpu.memory_space<vmem>>, %arg6: memref<1x1x256xf32, #tpu.memory_space<vmem>>, %arg7: memref<1x1x256xf32, #tpu.memory_space<vmem>>) attributes {dimension_semantics = [#tpu.dimension_semantics<parallel>, #tpu.dimension_semantics<parallel>, #tpu.dimension_semantics<arbitrary>], iteration_bounds = array<i64: 2, 1, 1>, scalar_prefetch = 0 : i64, scratch_operands = 0 : i64, tpu.core_type = #tpu.core_type<tc>, window_params = [{transform_indices = @transform_0, window_bounds = array<i64: 1, 4, 256>}, {transform_indices = @transform_1, window_bounds = array<i64: 1, 1, 256>}, {transform_indices = @transform_2, window_bounds = array<i64: 1, 1, 256>}, {transform_indices = @transform_3, window_bounds = array<i64: 1, 1, 256>}, {transform_indices = @transform_4, window_bounds = array<i64: 1, 1, 256>}]} {
    %c0_i32 = arith.constant 0 : i32
    %0 = arith.cmpi eq, %arg2, %c0_i32 : i32
    %1 = arith.extui %0 : i1 to i32
    %c0_i32_0 = arith.constant 0 : i32
    %2 = arith.cmpi ne, %1, %c0_i32_0 : i32
    scf.if %2 {
      %cst_24 = arith.constant 0.000000e+00 : f32
      %30 = vector.broadcast %cst_24 : f32 to vector<1x1x256xf32>
      %c0_25 = arith.constant 0 : index
      %c0_26 = arith.constant 0 : index
      %c0_27 = arith.constant 0 : index
      %31 = vector.load %arg6[%c0_25, %c0_26, %c0_27] : memref<1x1x256xf32, #tpu.memory_space<vmem>>, vector<1x1x256xf32>
      tpu.vector_store %arg6[%c0_25, %c0_26, %c0_27], %30 {strides = array<i32>} : memref<1x1x256xf32, #tpu.memory_space<vmem>>, vector<1x1x256xf32>,
      %cst_28 = arith.constant 0.000000e+00 : f32
      %32 = vector.broadcast %cst_28 : f32 to vector<1x1x256xf32>
      %c0_29 = arith.constant 0 : index
      %c0_30 = arith.constant 0 : index
      %c0_31 = arith.constant 0 : index
      %33 = vector.load %arg7[%c0_29, %c0_30, %c0_31] : memref<1x1x256xf32, #tpu.memory_space<vmem>>, vector<1x1x256xf32>
      tpu.vector_store %arg7[%c0_29, %c0_30, %c0_31], %32 {strides = array<i32>} : memref<1x1x256xf32, #tpu.memory_space<vmem>>, vector<1x1x256xf32>,
    } else {
    }
    %c0 = arith.constant 0 : index
    %c0_1 = arith.constant 0 : index
    %c0_2 = arith.constant 0 : index
    %3 = vector.load %arg3[%c0, %c0_1, %c0_2] : memref<1x4x256xf32, #tpu.memory_space<vmem>>, vector<1x4x256xf32>
    %c0_3 = arith.constant 0 : index
    %c0_4 = arith.constant 0 : index
    %c0_5 = arith.constant 0 : index
    %4 = vector.load %arg4[%c0_3, %c0_4, %c0_5] : memref<1x1x256xi32, #tpu.memory_space<vmem>>, vector<1x1x256xi32>
    %c0_6 = arith.constant 0 : index
    %c0_7 = arith.constant 0 : index
    %c0_8 = arith.constant 0 : index
    %5 = vector.load %arg5[%c0_6, %c0_7, %c0_8] : memref<1x1x256xf32, #tpu.memory_space<vmem>>, vector<1x1x256xf32>
    %cst = arith.constant dense<0xFF800000> : vector<1x256xf32>
    %6 = vector.multi_reduction <maximumf>, %3, %cst [1] : vector<1x4x256xf32> to vector<1x256xf32>
    %7 = vector.shape_cast %6 : vector<1x256xf32> to vector<1x1x256xf32>
    %8 = vector.broadcast %7 : vector<1x1x256xf32> to vector<1x4x256xf32>
    %9 = arith.subf %3, %8 : vector<1x4x256xf32>
    %10 = math.exp %9 : vector<1x4x256xf32>
    %cst_9 = arith.constant dense<0.000000e+00> : vector<1x256xf32>
    %11 = vector.multi_reduction <add>, %10, %cst_9 [1] : vector<1x4x256xf32> to vector<1x256xf32>
    %12 = vector.shape_cast %11 : vector<1x256xf32> to vector<1x1x256xf32>
    %13 = math.log %12 : vector<1x1x256xf32>
    %14 = arith.addf %7, %13 : vector<1x1x256xf32>
    %15 = tpu.iota {dimensions = array<i32: 1>} : vector<1x4x256xi32>
    %16 = vector.broadcast %4 : vector<1x1x256xi32> to vector<1x4x256xi32>
    %17 = arith.cmpi eq, %15, %16 : vector<1x4x256xi32>
    %cst_10 = arith.constant 0.000000e+00 : f32
    %18 = vector.broadcast %cst_10 : f32 to vector<1x4x256xf32>
    %19 = arith.select %17, %3, %18 : vector<1x4x256xi1>, vector<1x4x256xf32>
    %cst_11 = arith.constant dense<0.000000e+00> : vector<1x256xf32>
    %20 = vector.multi_reduction <add>, %19, %cst_11 [1] : vector<1x4x256xf32> to vector<1x256xf32>
    %21 = vector.shape_cast %20 : vector<1x256xf32> to vector<1x1x256xf32>
    %22 = arith.subf %14, %21 : vector<1x1x256xf32>
    %c0_12 = arith.constant 0 : index
    %c0_13 = arith.constant 0 : index
    %c0_14 = arith.constant 0 : index
    %23 = vector.load %arg6[%c0_12, %c0_13, %c0_14] : memref<1x1x256xf32, #tpu.memory_space<vmem>>, vector<1x1x256xf32>
    %24 = arith.mulf %22, %5 : vector<1x1x256xf32>
    %25 = arith.addf %23, %24 : vector<1x1x256xf32>
    %c0_15 = arith.constant 0 : index
    %c0_16 = arith.constant 0 : index
    %c0_17 = arith.constant 0 : index
    %26 = vector.load %arg6[%c0_15, %c0_16, %c0_17] : memref<1x1x256xf32, #tpu.memory_space<vmem>>, vector<1x1x256xf32>
    tpu.vector_store %arg6[%c0_15, %c0_16, %c0_17], %25 {strides = array<i32>} : memref<1x1x256xf32, #tpu.memory_space<vmem>>, vector<1x1x256xf32>,
    %c0_18 = arith.constant 0 : index
    %c0_19 = arith.constant 0 : index
    %c0_20 = arith.constant 0 : index
    %27 = vector.load %arg7[%c0_18, %c0_19, %c0_20] : memref<1x1x256xf32, #tpu.memory_space<vmem>>, vector<1x1x256xf32>
    %28 = arith.addf %27, %5 : vector<1x1x256xf32>
    %c0_21 = arith.constant 0 : index
    %c0_22 = arith.constant 0 : index
    %c0_23 = arith.constant 0 : index
    %29 = vector.load %arg7[%c0_21, %c0_22, %c0_23] : memref<1x1x256xf32, #tpu.memory_space<vmem>>, vector<1x1x256xf32>
    tpu.vector_store %arg7[%c0_21, %c0_22, %c0_23], %28 {strides = array<i32>} : memref<1x1x256xf32, #tpu.memory_space<vmem>>, vector<1x1x256xf32>,
    return
  }
  func.func @transform_0(%arg0: i32, %arg1: i32, %arg2: i32) -> (i32, i32, i32) {
    %c0_i32 = arith.constant 0 : i32
    %c0_i32_0 = arith.constant 0 : i32
    return %arg0, %c0_i32, %arg2 : i32, i32, i32
  }
  func.func @transform_1(%arg0: i32, %arg1: i32, %arg2: i32) -> (i32, i32, i32) {
    %c0_i32 = arith.constant 0 : i32
    %c0_i32_0 = arith.constant 0 : i32
    return %arg0, %c0_i32, %arg2 : i32, i32, i32
  }
  func.func @transform_2(%arg0: i32, %arg1: i32, %arg2: i32) -> (i32, i32, i32) {
    %c0_i32 = arith.constant 0 : i32
    %c0_i32_0 = arith.constant 0 : i32
    return %arg0, %c0_i32, %arg2 : i32, i32, i32
  }
  func.func @transform_3(%arg0: i32, %arg1: i32, %arg2: i32) -> (i32, i32, i32) {
    %c0_i32 = arith.constant 0 : i32
    %c0_i32_0 = arith.constant 0 : i32
    return %arg0, %arg1, %c0_i32 : i32, i32, i32
  }
  func.func @transform_4(%arg0: i32, %arg1: i32, %arg2: i32) -> (i32, i32, i32) {
    %c0_i32 = arith.constant 0 : i32
    %c0_i32_0 = arith.constant 0 : i32
    return %arg0, %arg1, %c0_i32 : i32, i32, i32
  }
}

</mosaic_0001>

<llo_original>
// kernel: tpu_custom_call.1
$region0: #{tpu_custom_call.1}
  #allocation0 [shape = 'u32[]', space=smem, size = 0x4, offset = 0x4, fixed_abs, tag = 'smem constant byte address 0x4 - core index']
  #allocation1 [shape = 'u32[144,128]{1,0:T(1,128)}', space=vmem, size = 0x12000, scoped, tag = 'internal scratch']
  %s0 = inlined_call_operand.hbm [shape: f32[2,4,256], index: 0, kind: input, shape index: {}]
  %s1 = inlined_call_operand.hbm [shape: s32[2,1,256], index: 1, kind: input, shape index: {}]
  %s2 = inlined_call_operand.hbm [shape: f32[2,1,256], index: 2, kind: input, shape index: {}]
  %s3 = inlined_call_operand.hbm [shape: f32[2,1,256], index: 3, kind: output, shape index: {0}]
  %s4 = inlined_call_operand.hbm [shape: f32[2,1,256], index: 4, kind: output, shape index: {1}]
  %5 = xla_tuple %s3, %s4
  %s6 = sld [smem:[#allocation0]]
  $region69: #{tpu_custom_call.1} parent=0
    _
  %s8 = ssub.s32 1, %s6
  %s9 = scalar_select 0, %s8, %s6
  $region1: #{tpu_custom_call.1} parent=0
    #allocation2 [shape = 'u8[8192]{0}', space=vmem, size = 0x2000, scoped, tag = 'input window, operand 0']
    #allocation3 [shape = 's32[2]{0}', space=sflag, size = 0x8, scoped, tag = 'scoped memory for tpu_custom_call.1']
    #allocation4 [shape = 's32[2]{0}', space=sflag, size = 0x8, scoped, tag = 'scoped memory for tpu_custom_call.1']
    #allocation5 [shape = 'u8[2048]{0}', space=vmem, size = 0x800, scoped, tag = 'input window, operand 1']
    #allocation6 [shape = 's32[2]{0}', space=sflag, size = 0x8, scoped, tag = 'scoped memory for tpu_custom_call.1']
    #allocation7 [shape = 'u8[2048]{0}', space=vmem, size = 0x800, scoped, tag = 'input window, operand 2']
    #allocation8 [shape = 'u8[2048]{0}', space=vmem, size = 0x800, scoped, tag = 'output window, operand 0']
    #allocation9 [shape = 'u8[2048]{0}', space=vmem, size = 0x800, scoped, tag = 'output window, operand 1']
    #allocation10 [shape = 's32[2]{0}', space=sflag, size = 0x8, scoped, tag = 'scoped memory for tpu_custom_call.1']
    %10 = vsyncpa [#allocation3], 0
    %s11 = scalar_lea.sflag [#allocation3], 1
    %12 = vsyncpa %s11, 0
    %13 = vsyncpa [#allocation6], 0
    %s14 = scalar_lea.sflag [#allocation6], 1
    %15 = vsyncpa %s14, 0
    %16 = vsyncpa [#allocation4], 0
    %s17 = scalar_lea.sflag [#allocation4], 1
    %18 = vsyncpa %s17, 0
    %19 = vsyncpa [#allocation10], 0
    %s20 = scalar_lea.sflag [#allocation10], 1
    %21 = vsyncpa %s20, 0
    loop: start=0, step=1, limit=4
    $region2: #{tpu_custom_call.1} parent=1 // loop_pre_header
      _
    $region3: #{tpu_custom_call.1} parent=1 // loop_header
      %s23 = sphi 0, %s27
      %p24 = scmp.ge.s32.totalorder %s23, 4
      %s30 = sphi 0, %s49
      %s31 = sphi 0, %s45
      %s32 = sphi 0, %s41
      %s33 = sphi 0, %s30
      %s34 = sphi 0, %s31
      %s35 = sphi 0, %s32
      %s36 = sphi 0, %s33
      %s37 = sphi 0, %s34
      %s38 = sphi 0, %s35
      %s54 = sphi 0, %s56
      %s57 = sphi 0, %s54
      %s58 = sphi 0, %s57
      %s74 = sphi 0, %s58
      %s82 = sphi 0, %s84
      %s85 = sphi 0, %s82
      %s86 = sphi 0, %s85
      %s102 = sphi 0, %s86
      %s110 = sphi 0, %s112
      %s113 = sphi 0, %s110
      %s114 = sphi 0, %s113
      %s130 = sphi 0, %s114
      %s138 = sphi 0, %s140
      %s141 = sphi 0, %s138
      %s142 = sphi 0, %s141
      %s158 = sphi 0, %s142
      %s166 = sphi 0, %s168
      %s169 = sphi 0, %s166
      %s170 = sphi 0, %s169
      %s186 = sphi 0, %s170
    $region4: #{tpu_custom_call.1} parent=1 // loop_header_branch
      %26 = sbr.rel (%p24) target = $region8
    $region5: #{tpu_custom_call.1} parent=1 // loop_body
      %s28 = ssub.s32 %s23, 1
      %s29 = ssub.s32 %s23, 2
      %s39 = sadd.s32 1, %s32
      %p40 = scmp.ge.s32.totalorder %s39, 1
      %s41 = scalar_select %p40, 0, %s39
      %s42 = sadd.s32 1, %s31
      %s43 = scalar_select %p40, %s42, %s31
      %p44 = scmp.ge.s32.totalorder %s43, 1
      %s45 = scalar_select %p44, 0, %s43
      %s46 = sadd.s32 1, %s30
      %s47 = scalar_select %p44, %s46, %s30
      %p48 = scmp.ge.s32.totalorder %s47, 2
      %s49 = scalar_select %p48, 0, %s47
      %s50 = ssub.s32 %s30, %s49
      %s51 = ssub.s32 %s32, %s41
      %s52 = sor.u32 %s50, %s51
      %p53 = scmp.eq.s32.totalorder %s52, 0
      %s55 = sadd.s32 %s54, 1
      %s56 = scalar_select %p53, %s54, %s55
      %p59 = pneg %p53
      %p60 = scmp.eq.s32.totalorder %s23, 1
      %p61 = por %p59, %p60
      %p62 = scmp.ne.s32.totalorder %s54, %s57
      %p63 = scmp.eq.s32.totalorder %s23, 0
      %p64 = por %p62, %p63
      %p65 = scmp.ne.s32.totalorder %s54, %s57
      %p66 = scmp.eq.s32.totalorder %s28, 1
      %p67 = por %p65, %p66
      %p68 = scmp.ne.s32.totalorder %s57, %s58
      %p69 = scmp.eq.s32.totalorder %s28, 0
      %p70 = por %p68, %p69
      %p71 = scmp.ne.s32.totalorder %s57, %s58
      %p72 = scmp.eq.s32.totalorder %s29, 1
      %p73 = por %p71, %p72
      %p75 = scmp.ne.s32.totalorder %s58, %s74
      %p76 = scmp.eq.s32.totalorder %s29, 0
      %p77 = por %p75, %p76
      %s78 = ssub.s32 %s30, %s49
      %s79 = ssub.s32 %s32, %s41
      %s80 = sor.u32 %s78, %s79
      %p81 = scmp.eq.s32.totalorder %s80, 0
      %s83 = sadd.s32 %s82, 1
      %s84 = scalar_select %p81, %s82, %s83
      %p87 = pneg %p81
      %p88 = scmp.eq.s32.totalorder %s23, 1
      %p89 = por %p87, %p88
      %p90 = scmp.ne.s32.totalorder %s82, %s85
      %p91 = scmp.eq.s32.totalorder %s23, 0
      %p92 = por %p90, %p91
      %p93 = scmp.ne.s32.totalorder %s82, %s85
      %p94 = scmp.eq.s32.totalorder %s28, 1
      %p95 = por %p93, %p94
      %p96 = scmp.ne.s32.totalorder %s85, %s86
      %p97 = scmp.eq.s32.totalorder %s28, 0
      %p98 = por %p96, %p97
      %p99 = scmp.ne.s32.totalorder %s85, %s86
      %p100 = scmp.eq.s32.totalorder %s29, 1
      %p101 = por %p99, %p100
      %p103 = scmp.ne.s32.totalorder %s86, %s102
      %p104 = scmp.eq.s32.totalorder %s29, 0
      %p105 = por %p103, %p104
      %s106 = ssub.s32 %s30, %s49
      %s107 = ssub.s32 %s32, %s41
      %s108 = sor.u32 %s106, %s107
      %p109 = scmp.eq.s32.totalorder %s108, 0
      %s111 = sadd.s32 %s110, 1
      %s112 = scalar_select %p109, %s110, %s111
      %p115 = pneg %p109
      %p116 = scmp.eq.s32.totalorder %s23, 1
      %p117 = por %p115, %p116
      %p118 = scmp.ne.s32.totalorder %s110, %s113
      %p119 = scmp.eq.s32.totalorder %s23, 0
      %p120 = por %p118, %p119
      %p121 = scmp.ne.s32.totalorder %s110, %s113
      %p122 = scmp.eq.s32.totalorder %s28, 1
      %p123 = por %p121, %p122
      %p124 = scmp.ne.s32.totalorder %s113, %s114
      %p125 = scmp.eq.s32.totalorder %s28, 0
      %p126 = por %p124, %p125
      %p127 = scmp.ne.s32.totalorder %s113, %s114
      %p128 = scmp.eq.s32.totalorder %s29, 1
      %p129 = por %p127, %p128
      %p131 = scmp.ne.s32.totalorder %s114, %s130
      %p132 = scmp.eq.s32.totalorder %s29, 0
      %p133 = por %p131, %p132
      %s134 = ssub.s32 %s30, %s49
      %s135 = ssub.s32 %s31, %s45
      %s136 = sor.u32 %s134, %s135
      %p137 = scmp.eq.s32.totalorder %s136, 0
      %s139 = sadd.s32 %s138, 1
      %s140 = scalar_select %p137, %s138, %s139
      %p143 = pneg %p137
      %p144 = scmp.eq.s32.totalorder %s23, 1
      %p145 = por %p143, %p144
      %p146 = scmp.ne.s32.totalorder %s138, %s141
      %p147 = scmp.eq.s32.totalorder %s23, 0
      %p148 = por %p146, %p147
      %p149 = scmp.ne.s32.totalorder %s138, %s141
      %p150 = scmp.eq.s32.totalorder %s28, 1
      %p151 = por %p149, %p150
      %p152 = scmp.ne.s32.totalorder %s141, %s142
      %p153 = scmp.eq.s32.totalorder %s28, 0
      %p154 = por %p152, %p153
      %p155 = scmp.ne.s32.totalorder %s141, %s142
      %p156 = scmp.eq.s32.totalorder %s29, 1
      %p157 = por %p155, %p156
      %p159 = scmp.ne.s32.totalorder %s142, %s158
      %p160 = scmp.eq.s32.totalorder %s29, 0
      %p161 = por %p159, %p160
      %s162 = ssub.s32 %s30, %s49
      %s163 = ssub.s32 %s31, %s45
      %s164 = sor.u32 %s162, %s163
      %p165 = scmp.eq.s32.totalorder %s164, 0
      %s167 = sadd.s32 %s166, 1
      %s168 = scalar_select %p165, %s166, %s167
      %p171 = pneg %p165
      %p172 = scmp.eq.s32.totalorder %s23, 1
      %p173 = por %p171, %p172
      %p174 = scmp.ne.s32.totalorder %s166, %s169
      %p175 = scmp.eq.s32.totalorder %s23, 0
      %p176 = por %p174, %p175
      %p177 = scmp.ne.s32.totalorder %s166, %s169
      %p178 = scmp.eq.s32.totalorder %s28, 1
      %p179 = por %p177, %p178
      %p180 = scmp.ne.s32.totalorder %s169, %s170
      %p181 = scmp.eq.s32.totalorder %s28, 0
      %p182 = por %p180, %p181
      %p183 = scmp.ne.s32.totalorder %s169, %s170
      %p184 = scmp.eq.s32.totalorder %s29, 1
      %p185 = por %p183, %p184
      %p187 = scmp.ne.s32.totalorder %s170, %s186
      %p188 = scmp.eq.s32.totalorder %s29, 0
      %p189 = por %p187, %p188
      %p190 = scmp.le.s32.totalorder 1, %s23
      %p191 = scmp.lt.s32.totalorder %s23, 3
      %p192 = pnand %p190, %p191
      %p193 = pneg %p192
      // Predicated region
      $region9: #{tpu_custom_call.1} parent=5 // pred_check
        _
      $region10: #{tpu_custom_call.1} parent=5 // pred_check_branch
        %195 = sbr.rel (%p192) target = $region12
      $region11: #{tpu_custom_call.1} parent=5 // pred_region
        %s196 = ssub.s32 %s23, 1
      $region12: #{tpu_custom_call.1} parent=5 // pred_fallthru
        _
      %p197 = scmp.lt.s32.totalorder %s23, 2
      // Predicated region
      $region13: #{tpu_custom_call.1} parent=5 // pred_check
        %p198 = pneg %p197
      $region14: #{tpu_custom_call.1} parent=5 // pred_check_branch
        %200 = sbr.rel (%p198) target = $region16
      $region15: #{tpu_custom_call.1} parent=5 // pred_region
        // Predicated region
        $region17: #{tpu_custom_call.1} parent=15 // pred_check
          %p201 = pneg %p64
        $region18: #{tpu_custom_call.1} parent=15 // pred_check_branch
          %203 = sbr.rel (%p201) target = $region20
        $region19: #{tpu_custom_call.1} parent=15 // pred_region
          %s204 = sand.u32 %s54, 1
          %s205 = scalar_lea.sflag [#allocation3], %s204
          %s206 = sand.u32 %s54, 1
          %s207 = smul.addr %s206, 8
          %s208 = scalar_lea.vmem [#allocation2], %s207
          %s209 = smul.u32 2, %s32
          %s211 = ssub.s32 128, 128
          %212 = vsyncadd %s205, %s211
          %s213 = smul.addr %s30, 2
          %s214 = sadd.s32 %s209, %s213
          %s215 = smul.addr %s214, 64
          %s216 = scalar_lea.hbm %s0, %s215
          %s218 = sshll.u32 %s208, 4
          %s219 = int_to_ptr.vmem [resolvable:$true] %s218
          %221 = dma.hbm_to_vmem [thread:$0]  %s216, 128, %s219, %s205
        $region20: #{tpu_custom_call.1} parent=15 // pred_fallthru
          _
        // Predicated region
        $region21: #{tpu_custom_call.1} parent=15 // pred_check
          %p222 = pneg %p92
        $region22: #{tpu_custom_call.1} parent=15 // pred_check_branch
          %224 = sbr.rel (%p222) target = $region24
        $region23: #{tpu_custom_call.1} parent=15 // pred_region
          %s225 = sand.u32 %s23, 1
          %s226 = scalar_lea.sflag [#allocation6], %s225
          %s227 = sand.u32 %s82, 1
          %s228 = smul.addr %s227, 2
          %s229 = scalar_lea.vmem [#allocation5], %s228
          %s230 = smul.u32 2, %s32
          %s232 = ssub.s32 32, 32
          %233 = vsyncadd %s226, %s232
          %s234 = smul.addr %s30, 2
          %s235 = sadd.s32 %s230, %s234
          %s236 = smul.addr %s235, 16
          %s237 = scalar_lea.hbm %s1, %s236
          %s239 = sshll.u32 %s229, 4
          %s240 = int_to_ptr.vmem [resolvable:$true] %s239
          %242 = dma.hbm_to_vmem [thread:$0]  %s237, 32, %s240, %s226
        $region24: #{tpu_custom_call.1} parent=15 // pred_fallthru
          _
        // Predicated region
        $region25: #{tpu_custom_call.1} parent=15 // pred_check
          %p243 = pneg %p120
        $region26: #{tpu_custom_call.1} parent=15 // pred_check_branch
          %245 = sbr.rel (%p243) target = $region28
        $region27: #{tpu_custom_call.1} parent=15 // pred_region
          %s246 = sand.u32 %s23, 1
          %s247 = scalar_lea.sflag [#allocation6], %s246
          %s248 = sand.u32 %s110, 1
          %s249 = smul.addr %s248, 2
          %s250 = scalar_lea.vmem [#allocation7], %s249
          %s251 = smul.u32 2, %s32
          %s253 = ssub.s32 32, 32
          %254 = vsyncadd %s247, %s253
          %s255 = smul.addr %s30, 2
          %s256 = sadd.s32 %s251, %s255
          %s257 = smul.addr %s256, 16
          %s258 = scalar_lea.hbm %s2, %s257
          %s260 = sshll.u32 %s250, 4
          %s261 = int_to_ptr.vmem [resolvable:$true] %s260
          %263 = dma.hbm_to_vmem [thread:$0]  %s258, 32, %s261, %s247
        $region28: #{tpu_custom_call.1} parent=15 // pred_fallthru
          _
      $region16: #{tpu_custom_call.1} parent=5 // pred_fallthru
        _
      %p264 = scmp.le.s32.totalorder 1, %s23
      %p265 = scmp.lt.s32.totalorder %s23, 3
      %p266 = pnand %p264, %p265
      %p267 = pneg %p266
      // Predicated region
      $region29: #{tpu_custom_call.1} parent=5 // pred_check
        _
      $region30: #{tpu_custom_call.1} parent=5 // pred_check_branch
        %269 = sbr.rel (%p266) target = $region32
      $region31: #{tpu_custom_call.1} parent=5 // pred_region
        %s270 = ssub.s32 %s23, 1
        %s271 = sand.u32 %s57, 1
        %s272 = scalar_lea.sflag [#allocation3], %s271
        %s273 = sand.u32 %s57, 1
        %s274 = smul.addr %s273, 8
        %s275 = scalar_lea.vmem [#allocation2], %s274
        // Predicated region
        $region33: #{tpu_custom_call.1} parent=31 // pred_check
          %p276 = pneg %p70
        $region34: #{tpu_custom_call.1} parent=31 // pred_check_branch
          %278 = sbr.rel (%p276) target = $region36
        $region35: #{tpu_custom_call.1} parent=31 // pred_region
          %279 = dma.done %s272, 128
        $region36: #{tpu_custom_call.1} parent=31 // pred_fallthru
          _
        %s280 = sand.u32 %s28, 1
        %s281 = scalar_lea.sflag [#allocation6], %s280
        %s282 = sand.u32 %s85, 1
        %s283 = smul.addr %s282, 2
        %s284 = scalar_lea.vmem [#allocation5], %s283
        // Predicated region
        $region37: #{tpu_custom_call.1} parent=31 // pred_check
          %p285 = pneg %p98
        $region38: #{tpu_custom_call.1} parent=31 // pred_check_branch
          %287 = sbr.rel (%p285) target = $region40
        $region39: #{tpu_custom_call.1} parent=31 // pred_region
          %288 = dma.done %s281, 32
        $region40: #{tpu_custom_call.1} parent=31 // pred_fallthru
          _
        %s289 = sand.u32 %s28, 1
        %s290 = scalar_lea.sflag [#allocation6], %s289
        %s291 = sand.u32 %s113, 1
        %s292 = smul.addr %s291, 2
        %s293 = scalar_lea.vmem [#allocation7], %s292
        // Predicated region
        $region41: #{tpu_custom_call.1} parent=31 // pred_check
          %p294 = pneg %p126
        $region42: #{tpu_custom_call.1} parent=31 // pred_check_branch
          %296 = sbr.rel (%p294) target = $region44
        $region43: #{tpu_custom_call.1} parent=31 // pred_region
          %297 = dma.done %s290, 32
        $region44: #{tpu_custom_call.1} parent=31 // pred_fallthru
          _
        %s298 = sand.u32 %s57, 1
        %s299 = scalar_lea.sflag [#allocation3], %s298
        %s300 = sand.u32 %s57, 1
        %s301 = smul.addr %s300, 8
        %s302 = scalar_lea.vmem [#allocation2], %s301
        %p303 = pneg %p70
        %p304 = pneg %p67
        %s305 = sand.u32 %s28, 1
        %s306 = scalar_lea.sflag [#allocation6], %s305
        %s307 = sand.u32 %s85, 1
        %s308 = smul.addr %s307, 2
        %s309 = scalar_lea.vmem [#allocation5], %s308
        %p310 = pneg %p98
        %p311 = pneg %p95
        %s312 = sand.u32 %s28, 1
        %s313 = scalar_lea.sflag [#allocation6], %s312
        %s314 = sand.u32 %s113, 1
        %s315 = smul.addr %s314, 2
        %s316 = scalar_lea.vmem [#allocation7], %s315
        %p317 = pneg %p126
        %p318 = pneg %p123
        %p319 = pneg %p154
        %p320 = pneg %p151
        %s321 = sand.u32 %s141, 1
        %s322 = scalar_lea.sflag [#allocation4], %s321
        %s323 = sand.u32 %s141, 1
        %s324 = smul.addr %s323, 2
        %s325 = scalar_lea.vmem [#allocation8], %s324
        %p326 = pneg %p182
        %p327 = pneg %p179
        %s328 = sand.u32 %s169, 1
        %s329 = scalar_lea.sflag [#allocation10], %s328
        %s330 = sand.u32 %s169, 1
        %s331 = smul.addr %s330, 2
        %s332 = scalar_lea.vmem [#allocation9], %s331
        %s333 = smul.u32 2, %s35
        %s334 = smul.u32 2, %s35
        %s335 = smul.u32 2, %s35
        %p336 = scmp.eq.s32.totalorder %s35, 0
        // Predicated region
        $region45: #{tpu_custom_call.1} parent=31 // pred_check
          %p337 = pneg %p336
        $region46: #{tpu_custom_call.1} parent=31 // pred_check_branch
          %339 = sbr.rel (%p337) target = $region48
        $region47: #{tpu_custom_call.1} parent=31 // pred_region
          %v340 = vlaneseq
          %vm341 = vcmp.ge.s32.totalorder %v340, 0
          %vm342 = vcmp.lt.s32.totalorder %v340, 256
          %vm343 = vmand %vm341, %vm342
          %344 = vst.msk [vmem:[%s325] sm:$0x3] %vm343, 0.0
          %345 = vst.msk [vmem:[%s332] sm:$0x3] %vm343, 0.0
        $region48: #{tpu_custom_call.1} parent=31 // pred_fallthru
          _
        %v346 = vld [vmem:[%s275] sm:$0xff]
        %v347 = vld [vmem:[%s284] sm:$0x3]
        %v348 = vld [vmem:[%s293] sm:$0x3]
        %v350 = vcombine.high %v346, %v346
        %vm352 = vcmask 1043456
        %v353 = vsel %vm352, %v346, -inf
        %v354 = vrot.slane %v353, 4
        %v355 = vmax.f32 %v353, %v354
        %v356 = vrot.slane %v355, 2
        %v357 = vmax.f32 %v355, %v356
        %v358 = vrot.slane %v357, 1
        %v359 = vmax.f32 %v357, %v358
        %v360 = vsel %vm352, %v350, -inf
        %v361 = vrot.slane %v360, 4
        %v362 = vmax.f32 %v360, %v361
        %v363 = vrot.slane %v362, 2
        %v364 = vmax.f32 %v362, %v363
        %v365 = vrot.slane %v364, 1
        %v366 = vmax.f32 %v364, %v365
        %v369 = vcombine.low %v359, %v366
        %v371 = vsub.f32 %v346, %v369
        %v372 = vmul.f32 %v371, 1.442695
        %v373 = vpow.pop %v372
        %v375 = vcombine.high %v373, %v373
        %v377 = vsel %vm352, %v373, 0.0
        %v378 = vrot.slane %v377, 4
        %v379 = vadd.f32 %v377, %v378
        %v380 = vrot.slane %v379, 2
        %v381 = vadd.f32 %v379, %v380
        %v382 = vrot.slane %v381, 1
        %v383 = vadd.f32 %v381, %v382
        %v384 = vsel %vm352, %v375, 0.0
        %v385 = vrot.slane %v384, 4
        %v386 = vadd.f32 %v384, %v385
        %v387 = vrot.slane %v386, 2
        %v388 = vadd.f32 %v386, %v387
        %v389 = vrot.slane %v388, 1
        %v390 = vadd.f32 %v388, %v389
        %v391 = vlog2.pop %v383
        %v392 = vmul.f32 %v391, 0.6931472
        %v393 = vlog2.pop %v390
        %v394 = vmul.f32 %v393, 0.6931472
        %v395 = vadd.f32 %v359, %v392
        %v396 = vadd.f32 %v366, %v394
        %v397 = vlaneseq
        %v398 = vshrl.u32 %v397, 7
        %v399 = vlaneseq
        %v400 = vshrl.u32 %v399, 7
        %v401 = vsub.s32 0, %v400
        %v402 = vrot.slane %v347, %v401
        %v403 = vlaneseq
        %v404 = vshrl.u32 %v403, 7
        %v405 = vsub.s32 1, %v404
        %v406 = vrot.slane %v347, %v405
        %vm407 = vcmp.eq.s32.totalorder %v398, %v402
        %vm408 = vcmp.eq.s32.totalorder %v398, %v406
        %v409 = vsel %vm407, %v346, 0.0
        %v410 = vsel %vm408, %v350, 0.0
        %v411 = vsel %vm352, %v409, 0.0
        %v412 = vrot.slane %v411, 4
        %v413 = vadd.f32 %v411, %v412
        %v414 = vrot.slane %v413, 2
        %v415 = vadd.f32 %v413, %v414
        %v416 = vrot.slane %v415, 1
        %v417 = vadd.f32 %v415, %v416
        %v418 = vsel %vm352, %v410, 0.0
        %v419 = vrot.slane %v418, 4
        %v420 = vadd.f32 %v418, %v419
        %v421 = vrot.slane %v420, 2
        %v422 = vadd.f32 %v420, %v421
        %v423 = vrot.slane %v422, 1
        %v424 = vadd.f32 %v422, %v423
        %v425 = vsub.f32 %v395, %v417
        %v426 = vsub.f32 %v396, %v424
        %v427 = vld [vmem:[%s325] sm:$0x3]
        %v429 = vlaneseq
        %v430 = vshrl.u32 %v429, 7
        %v431 = vsub.s32 0, %v430
        %v432 = vrot.slane %v348, %v431
        %v433 = vlaneseq
        %v434 = vshrl.u32 %v433, 7
        %v435 = vsub.s32 1, %v434
        %v436 = vrot.slane %v348, %v435
        %v439 = vmul.f32 %v425, %v432
        %v440 = vmul.f32 %v426, %v436
        %v443 = vcombine.low %v439, %v440
        %v445 = vunpack.c.l.s4 1966171168
        %v446 = vunpack.c.0.s8 %v445
        %v447 = vlaneseq
        %v448 = vshrl.u32 %v447, 7
        %v449 = vsub.s32 %v446, %v448
        %v450 = vrot.slane %v443, %v449
        %v452 = vunpack.c.l.s4 1966171168
        %v453 = vunpack.c.0.s8 %v452
        %v454 = vlaneseq
        %v455 = vshrl.u32 %v454, 7
        %v456 = vsub.s32 %v453, %v455
        %v457 = vrot.slane %v450, %v456
        %v459 = vadd.f32 %v427, %v457
        %v460 = vlaneseq
        %vm461 = vcmp.ge.s32.totalorder %v460, 0
        %vm462 = vcmp.lt.s32.totalorder %v460, 256
        %vm463 = vmand %vm461, %vm462
        %464 = vst.msk [vmem:[%s325] sm:$0x3] %vm463, %v459
        %v465 = vld [vmem:[%s332] sm:$0x3]
        %v466 = vadd.f32 %v465, %v348
        %467 = vst.msk [vmem:[%s332] sm:$0x3] %vm463, %v466
        %s468 = sand.u32 %s141, 1
        %s469 = scalar_lea.sflag [#allocation4], %s468
        %s470 = sand.u32 %s141, 1
        %s471 = smul.addr %s470, 2
        %s472 = scalar_lea.vmem [#allocation8], %s471
        %s473 = sand.u32 %s169, 1
        %s474 = scalar_lea.sflag [#allocation10], %s473
        %s475 = sand.u32 %s169, 1
        %s476 = smul.addr %s475, 2
        %s477 = scalar_lea.vmem [#allocation9], %s476
        // Predicated region
        $region49: #{tpu_custom_call.1} parent=31 // pred_check
          %p478 = pneg %p151
        $region50: #{tpu_custom_call.1} parent=31 // pred_check_branch
          %480 = sbr.rel (%p478) target = $region52
        $region51: #{tpu_custom_call.1} parent=31 // pred_region
          %s482 = ssub.s32 32, 32
          %483 = vsyncadd %s469, %s482
          %s484 = smul.addr %s34, 2
          %s485 = smul.addr %s33, 2
          %s486 = sadd.s32 %s484, %s485
          %s487 = smul.addr %s486, 16
          %s488 = scalar_lea.hbm %s3, %s487
          %s490 = sshll.u32 %s472, 4
          %s491 = int_to_ptr.vmem [resolvable:$true] %s490
          %493 = dma.vmem_to_hbm [thread:$0]  %s491, 32, %s488, %s469
        $region52: #{tpu_custom_call.1} parent=31 // pred_fallthru
          _
        // Predicated region
        $region53: #{tpu_custom_call.1} parent=31 // pred_check
          %p494 = pneg %p179
        $region54: #{tpu_custom_call.1} parent=31 // pred_check_branch
          %496 = sbr.rel (%p494) target = $region56
        $region55: #{tpu_custom_call.1} parent=31 // pred_region
          %s498 = ssub.s32 32, 32
          %499 = vsyncadd %s474, %s498
          %s500 = smul.addr %s34, 2
          %s501 = smul.addr %s33, 2
          %s502 = sadd.s32 %s500, %s501
          %s503 = smul.addr %s502, 16
          %s504 = scalar_lea.hbm %s4, %s503
          %s506 = sshll.u32 %s477, 4
          %s507 = int_to_ptr.vmem [resolvable:$true] %s506
          %509 = dma.vmem_to_hbm [thread:$0]  %s507, 32, %s504, %s474
        $region56: #{tpu_custom_call.1} parent=31 // pred_fallthru
          _
      $region32: #{tpu_custom_call.1} parent=5 // pred_fallthru
        _
      %p510 = scmp.le.s32.totalorder 2, %s23
      // Predicated region
      $region57: #{tpu_custom_call.1} parent=5 // pred_check
        %p511 = pneg %p510
      $region58: #{tpu_custom_call.1} parent=5 // pred_check_branch
        %513 = sbr.rel (%p511) target = $region60
      $region59: #{tpu_custom_call.1} parent=5 // pred_region
        %s514 = ssub.s32 %s23, 2
        // Predicated region
        $region61: #{tpu_custom_call.1} parent=59 // pred_check
          %p515 = pneg %p157
        $region62: #{tpu_custom_call.1} parent=59 // pred_check_branch
          %517 = sbr.rel (%p515) target = $region64
        $region63: #{tpu_custom_call.1} parent=59 // pred_region
          %s518 = sand.u32 %s142, 1
          %s519 = scalar_lea.sflag [#allocation4], %s518
          %s520 = sand.u32 %s142, 1
          %s521 = smul.addr %s520, 2
          %s522 = scalar_lea.vmem [#allocation8], %s521
          %523 = dma.done %s519, 32
        $region64: #{tpu_custom_call.1} parent=59 // pred_fallthru
          _
        // Predicated region
        $region65: #{tpu_custom_call.1} parent=59 // pred_check
          %p524 = pneg %p185
        $region66: #{tpu_custom_call.1} parent=59 // pred_check_branch
          %526 = sbr.rel (%p524) target = $region68
        $region67: #{tpu_custom_call.1} parent=59 // pred_region
          %s527 = sand.u32 %s170, 1
          %s528 = scalar_lea.sflag [#allocation10], %s527
          %s529 = sand.u32 %s170, 1
          %s530 = smul.addr %s529, 2
          %s531 = scalar_lea.vmem [#allocation9], %s530
          %532 = dma.done %s528, 32
        $region68: #{tpu_custom_call.1} parent=59 // pred_fallthru
          _
      $region60: #{tpu_custom_call.1} parent=5 // pred_fallthru
        _
    $region6: #{tpu_custom_call.1} parent=1 // loop_footer
      %s27 = sadd.s32 1, %s23
    $region7: #{tpu_custom_call.1} parent=1 // loop_footer_branch
      %22 = sbr.rel target = $region3
    $region8: #{tpu_custom_call.1} parent=1 // loop_exit
      _
    %533 = vsyncpa [#allocation3], 1
    %s534 = scalar_lea.sflag [#allocation3], 1
    %535 = vsyncpa %s534, 1
    %536 = vsyncpa [#allocation6], 1
    %s537 = scalar_lea.sflag [#allocation6], 1
    %538 = vsyncpa %s537, 1
    %539 = vsyncpa [#allocation4], 1
    %s540 = scalar_lea.sflag [#allocation4], 1
    %541 = vsyncpa %s540, 1
    %542 = vsyncpa [#allocation10], 1
    %s543 = scalar_lea.sflag [#allocation10], 1
    %544 = vsyncpa %s543, 1

</llo_original>
